<compile_context>
chip_gen: v7x
topology: tpu7x:2x2x1
jax: 0.10.0
libtpu: 0.0.40
codegen_flags: <defaults>
</compile_context>

<pallas_src>
import functools

import jax
import jax.numpy as jnp
from jax import lax
from jax.experimental import pallas as pl
from jax.experimental.pallas import tpu as pltpu

_LANES = 128
_SUBLANES = 8
_TILE = _SUBLANES * _LANES      # 1024: alignment unit for the kernel fast path


def _chip_config():
    """Per-generation tiling knobs (best effort; falls back to the safe config)."""
    kind = ""
    try:
        kind = jax.devices()[0].device_kind.lower()
    except Exception:
        pass
    if "v7" in kind or "7x" in kind:
        # 2 TensorCores, 64 MiB VMEM/TC, ~3.2 TB/s HBM: bigger tiles + both cores.
        # Live set = 2 inputs x 2 pipeline buffers x 8 MiB = 32 MiB < 48 MiB limit.
        return 16384, 2, 48 * 1024 * 1024
    # v5e / v6e: single TensorCore, 128 MiB physical VMEM.
    # Live set = 2 x 2 x 4 MiB = 16 MiB < 40 MiB limit.
    return 8192, 1, 40 * 1024 * 1024


def _dice_reduce_kernel(p_ref, t_ref, inter_ref, sump_ref, sumt_ref,
                        acc_i, acc_p, acc_t, *,
                        total_rows, block_rows, steps_per_slice, total_blocks,
                        needs_mask):
    c = pl.program_id(0)    # parallel slice (second TensorCore on v7x)
    s = pl.program_id(1)    # reduction step within the slice

    @pl.when(s == 0)
    def _init():
        acc_i[...] = jnp.zeros_like(acc_i)
        acc_p[...] = jnp.zeros_like(acc_p)
        acc_t[...] = jnp.zeros_like(acc_t)

    sub = block_rows // _SUBLANES

    def _accumulate(mask_rows):
        x = p_ref[...].astype(jnp.float32)
        t = t_ref[...].astype(jnp.float32)
        # sigmoid(x) == 0.5 * (tanh(x/2) + 1): single EUP push + two cheap VALU
        # ops; avoids a precise reciprocal/divide on the hot path.
        p = 0.5 * (jnp.tanh(0.5 * x) + 1.0)
        if mask_rows:
            # Row-level validity mask, paid only by the boundary / re-read blocks.
            # Uses the UN-clamped block index so index-map-clamped re-read blocks
            # contribute exactly zero; row indices (not element indices) avoid any
            # int32 overflow for very large inputs.
            rb = c * steps_per_slice + s
            row = lax.broadcasted_iota(jnp.int32, (block_rows, _LANES), 0)
            valid = (rb * block_rows + row) < total_rows
            p = jnp.where(valid, p, 0.0)   # where(): discards OOB NaN/Inf garbage
            t = jnp.where(valid, t, 0.0)
        # Per-(sublane, lane) accumulation: pure VPU tree adds; the single
        # cross-lane (XLU) reduction happens once, in the finalize.
        acc_i[...] += jnp.sum((p * t).reshape(sub, _SUBLANES, _LANES), axis=0)
        acc_p[...] += jnp.sum(p.reshape(sub, _SUBLANES, _LANES), axis=0)
        acc_t[...] += jnp.sum(t.reshape(sub, _SUBLANES, _LANES), axis=0)

    if needs_mask:
        rb = c * steps_per_slice + s
        # Predicate is rb >= total_blocks - 1 (NOT "last s" / "last slice") so it
        # covers BOTH the partial last block and the clamped re-read blocks of the
        # extra parallel slice; anything else would double-count the re-reads.

        @pl.when(rb < total_blocks - 1)
        def _steady():
            _accumulate(False)

        @pl.when(rb >= total_blocks - 1)
        def _boundary():
            _accumulate(True)
    else:
        _accumulate(False)

    @pl.when(s == pl.num_programs(1) - 1)
    def _fin():
        inter_ref[...] = jnp.sum(acc_i[...]).reshape(1, 1, 1)
        sump_ref[...] = jnp.sum(acc_p[...]).reshape(1, 1, 1)
        sumt_ref[...] = jnp.sum(acc_t[...]).reshape(1, 1, 1)


def _partial_sums(pred_flat, targ_flat, *, max_rows=None, nslices=None):
    """Streaming reduction over 1024-aligned flat inputs.

    Returns (sum(sigmoid(p) * t), sum(sigmoid(p)), sum(t)) as f32 scalars.
    """
    n = pred_flat.shape[0]                 # multiple of 1024
    rows = n // _LANES                     # multiple of 8
    p2d = pred_flat.reshape(rows, _LANES)  # re-view of a contiguous buffer
    t2d = targ_flat.reshape(rows, _LANES)

    cfg_rows, cfg_slices, vmem_limit = _chip_config()
    max_rows = cfg_rows if max_rows is None else max_rows
    nslices = cfg_slices if nslices is None else nslices

    block_rows = min(max_rows, rows)       # multiple of 8, or the full dim
    total_blocks = -(-rows // block_rows)
    steps_per_slice = -(-total_blocks // nslices)
    needs_mask = (rows % block_rows != 0) or (nslices * steps_per_slice != total_blocks)

    def in_map(c, s):
        rb = c * steps_per_slice + s
        # Clamp so the DMA never targets a fully out-of-range block; the kernel
        # masks with the UN-clamped index, so re-read blocks contribute zero.
        return (jnp.minimum(rb, total_blocks - 1), 0)

    in_spec = pl.BlockSpec((block_rows, _LANES), in_map)
    out_spec = pl.BlockSpec((1, 1, 1), lambda c, s: (c, 0, 0))
    out_shape = (jax.ShapeDtypeStruct((nslices, 1, 1), jnp.float32),) * 3

    kernel = functools.partial(
        _dice_reduce_kernel,
        total_rows=rows,
        block_rows=block_rows,
        steps_per_slice=steps_per_slice,
        total_blocks=total_blocks,
        needs_mask=needs_mask,
    )

    inter, sum_p, sum_t = pl.pallas_call(
        kernel,
        out_shape=out_shape,
        grid_spec=pltpu.PrefetchScalarGridSpec(
            num_scalar_prefetch=0,
            grid=(nslices, steps_per_slice),
            in_specs=[in_spec, in_spec],
            out_specs=[out_spec, out_spec, out_spec],
            scratch_shapes=[pltpu.VMEM((_SUBLANES, _LANES), jnp.float32)] * 3,
        ),
        compiler_params=pltpu.CompilerParams(
            dimension_semantics=("parallel", "arbitrary"),
            vmem_limit_bytes=vmem_limit,
        ),
    )(p2d, t2d)

    # Combine the (tiny) per-slice partials.
    return jnp.sum(inter), jnp.sum(sum_p), jnp.sum(sum_t)


@jax.jit
def smp_dice_loss(predictions, targets):
    """Binary-mode Dice loss with from_logits=True. Returns a scalar."""
    n = predictions.size
    pred_flat = predictions.reshape(-1)   # no astype / no pad: kernel casts in VMEM
    targ_flat = targets.reshape(-1)

    n_aligned = (n // _TILE) * _TILE      # kernel covers the 1024-aligned prefix
    inter = jnp.float32(0.0)
    sum_p = jnp.float32(0.0)
    sum_t = jnp.float32(0.0)

    if n_aligned > 0:
        if n_aligned == n:
            kp, kt = pred_flat, targ_flat
        else:
            kp = pred_flat[:n_aligned]
            kt = targ_flat[:n_aligned]
        ki, kp_sum, kt_sum = _partial_sums(kp, kt)
        inter, sum_p, sum_t = inter + ki, sum_p + kp_sum, sum_t + kt_sum

    if n_aligned != n:
        # <=1023-element tail: a tiny fused XLA reduction is far cheaper than a
        # full jnp.pad pass (which would ~3x the HBM traffic of this mem-bound op).
        tp = jax.nn.sigmoid(pred_flat[n_aligned:].astype(jnp.float32))
        tt = targ_flat[n_aligned:].astype(jnp.float32)
        inter = inter + jnp.sum(tp * tt)
        sum_p = sum_p + jnp.sum(tp)
        sum_t = sum_t + jnp.sum(tt)

    smooth = jnp.float32(0.0)
    eps = jnp.float32(1e-7)
    card = sum_p + sum_t
    dice = (2.0 * inter + smooth) / jnp.maximum(card + smooth, eps)
    loss = 1.0 - dice
    loss = loss * (sum_t > 0).astype(loss.dtype)
    # classes=None, single (binary) class -> mean over the class axis is the value.
    return loss


def _reference(predictions, targets):
    p = jax.nn.sigmoid(predictions.astype(jnp.float32)).reshape(-1)
    t = targets.astype(jnp.float32).reshape(-1)
    inter = jnp.sum(p * t)
    card = jnp.sum(p) + jnp.sum(t)
    dice = (2.0 * inter) / jnp.maximum(card, 1e-7)
    return (1.0 - dice) * (jnp.sum(t) > 0).astype(jnp.float32)


if __name__ == "__main__":
    key = jax.random.PRNGKey(0)
    keys = jax.random.split(key, 8)

    def check(pred, targ, tol=1e-4):
        loss = smp_dice_loss(pred, targ)
        jax.block_until_ready(loss)
        ref = _reference(pred, targ)
        assert jnp.allclose(loss, ref, atol=tol, rtol=tol), (loss, ref)

    # 1) Aligned fast path (element count multiple of 1024): 2*1*32*64 = 4096.
    p1 = jax.random.normal(keys[0], (2, 1, 32, 64), dtype=jnp.float32)
    t1 = (jax.random.uniform(keys[1], (2, 1, 32, 64)) > 0.5).astype(jnp.float32)
    check(p1, t1)

    # 2) Unaligned: kernel on the 1024-aligned prefix + tiny jnp tail (3*1*24*24 = 1728).
    p2 = jax.random.normal(keys[2], (3, 1, 24, 24), dtype=jnp.float32)
    t2 = (jax.random.uniform(keys[3], (3, 1, 24, 24)) > 0.5).astype(jnp.float32)
    check(p2, t2)

    # 3) Tiny input (<1024 elements): pure-jnp path (2*1*16*16 = 512).
    p3 = jax.random.normal(keys[4], (2, 1, 16, 16), dtype=jnp.float32)
    t3 = (jax.random.uniform(keys[5], (2, 1, 16, 16)) > 0.5).astype(jnp.float32)
    check(p3, t3)

    # 4) bf16 logits (narrow streaming dtype) on the aligned path; cast happens in VMEM.
    p4 = jax.random.normal(keys[6], (2, 1, 32, 64), dtype=jnp.bfloat16)
    t4 = (jax.random.uniform(keys[7], (2, 1, 32, 64)) > 0.5).astype(jnp.float32)
    check(p4, t4)

    # 5) Forced tiny tiling to exercise steady-state / partial-last-block /
    #    clamped-re-read branches of the kernel on every chip generation:
    #    5*1*32*32 = 5120 elems -> 40 rows, block of 16 rows, 2 parallel slices.
    p5 = jax.random.normal(keys[0], (5, 1, 32, 32), dtype=jnp.float32)
    t5 = (jax.random.uniform(keys[1], (5, 1, 32, 32)) > 0.5).astype(jnp.float32)
    i5, sp5, st5 = _partial_sums(p5.reshape(-1), t5.reshape(-1), max_rows=16, nslices=2)
    dice5 = 2.0 * i5 / jnp.maximum(sp5 + st5, 1e-7)
    loss5 = (1.0 - dice5) * (st5 > 0).astype(jnp.float32)
    jax.block_until_ready(loss5)
    ref5 = _reference(p5, t5)
    assert jnp.allclose(loss5, ref5, atol=1e-4, rtol=1e-4), (loss5, ref5)

    print("KERNEL_OK")
</pallas_src>

<mosaic_0001>
module attributes {stable_mosaic.version = 11 : i64} {
  func.func @_dice_reduce_kernel(%arg0: i32, %arg1: i32, %arg2: memref<32x128xf32, #tpu.memory_space<vmem>>, %arg3: memref<32x128xf32, #tpu.memory_space<vmem>>, %arg4: memref<1x1x1xf32, #tpu.memory_space<vmem>>, %arg5: memref<1x1x1xf32, #tpu.memory_space<vmem>>, %arg6: memref<1x1x1xf32, #tpu.memory_space<vmem>>, %arg7: memref<8x128xf32, #tpu.memory_space<vmem>>, %arg8: memref<8x128xf32, #tpu.memory_space<vmem>>, %arg9: memref<8x128xf32, #tpu.memory_space<vmem>>) attributes {dimension_semantics = [#tpu.dimension_semantics<parallel>, #tpu.dimension_semantics<arbitrary>], iteration_bounds = array<i64: 1, 1>, scalar_prefetch = 0 : i64, scratch_operands = 3 : i64, tpu.core_type = #tpu.core_type<tc>, window_params = [{transform_indices = @transform_0, window_bounds = array<i64: 32, 128>}, {transform_indices = @transform_1, window_bounds = array<i64: 32, 128>}, {transform_indices = @transform_2, window_bounds = array<i64: 1, 1, 1>}, {transform_indices = @transform_3, window_bounds = array<i64: 1, 1, 1>}, {transform_indices = @transform_4, window_bounds = array<i64: 1, 1, 1>}]} {
    %c0_i32 = arith.constant 0 : i32
    %0 = arith.cmpi eq, %arg1, %c0_i32 : i32
    %1 = arith.extui %0 : i1 to i32
    %c0_i32_0 = arith.constant 0 : i32
    %2 = arith.cmpi ne, %1, %c0_i32_0 : i32
    scf.if %2 {
      %cst_23 = arith.constant 0.000000e+00 : f32
      %31 = vector.broadcast %cst_23 : f32 to vector<8x128xf32>
      %c0_24 = arith.constant 0 : index
      %c0_25 = arith.constant 0 : index
      %32 = vector.load %arg7[%c0_24, %c0_25] : memref<8x128xf32, #tpu.memory_space<vmem>>, vector<8x128xf32>
      tpu.vector_store %arg7[%c0_24, %c0_25], %31 {strides = array<i32>} : memref<8x128xf32, #tpu.memory_space<vmem>>, vector<8x128xf32>,
      %cst_26 = arith.constant 0.000000e+00 : f32
      %33 = vector.broadcast %cst_26 : f32 to vector<8x128xf32>
      %c0_27 = arith.constant 0 : index
      %c0_28 = arith.constant 0 : index
      %34 = vector.load %arg8[%c0_27, %c0_28] : memref<8x128xf32, #tpu.memory_space<vmem>>, vector<8x128xf32>
      tpu.vector_store %arg8[%c0_27, %c0_28], %33 {strides = array<i32>} : memref<8x128xf32, #tpu.memory_space<vmem>>, vector<8x128xf32>,
      %cst_29 = arith.constant 0.000000e+00 : f32
      %35 = vector.broadcast %cst_29 : f32 to vector<8x128xf32>
      %c0_30 = arith.constant 0 : index
      %c0_31 = arith.constant 0 : index
      %36 = vector.load %arg9[%c0_30, %c0_31] : memref<8x128xf32, #tpu.memory_space<vmem>>, vector<8x128xf32>
      tpu.vector_store %arg9[%c0_30, %c0_31], %35 {strides = array<i32>} : memref<8x128xf32, #tpu.memory_space<vmem>>, vector<8x128xf32>,
    } else {
    }
    %c0 = arith.constant 0 : index
    %c0_1 = arith.constant 0 : index
    %3 = vector.load %arg2[%c0, %c0_1] : memref<32x128xf32, #tpu.memory_space<vmem>>, vector<32x128xf32>
    %c0_2 = arith.constant 0 : index
    %c0_3 = arith.constant 0 : index
    %4 = vector.load %arg3[%c0_2, %c0_3] : memref<32x128xf32, #tpu.memory_space<vmem>>, vector<32x128xf32>
    %cst = arith.constant 5.000000e-01 : f32
    %5 = vector.broadcast %cst : f32 to vector<32x128xf32>
    %6 = arith.mulf %5, %3 : vector<32x128xf32>
    %7 = math.tanh %6 : vector<32x128xf32>
    %cst_4 = arith.constant 1.000000e+00 : f32
    %8 = vector.broadcast %cst_4 : f32 to vector<32x128xf32>
    %9 = arith.addf %7, %8 : vector<32x128xf32>
    %cst_5 = arith.constant 5.000000e-01 : f32
    %10 = vector.broadcast %cst_5 : f32 to vector<32x128xf32>
    %11 = arith.mulf %10, %9 : vector<32x128xf32>
    %c0_6 = arith.constant 0 : index
    %c0_7 = arith.constant 0 : index
    %12 = vector.load %arg7[%c0_6, %c0_7] : memref<8x128xf32, #tpu.memory_space<vmem>>, vector<8x128xf32>
    %13 = arith.mulf %11, %4 : vector<32x128xf32>
    %14 = vector.shape_cast %13 : vector<32x128xf32> to vector<4x8x128xf32>
    %cst_8 = arith.constant dense<0.000000e+00> : vector<8x128xf32>
    %15 = vector.multi_reduction <add>, %14, %cst_8 [0] : vector<4x8x128xf32> to vector<8x128xf32>
    %16 = arith.addf %12, %15 : vector<8x128xf32>
    %c0_9 = arith.constant 0 : index
    %c0_10 = arith.constant 0 : index
    %17 = vector.load %arg7[%c0_9, %c0_10] : memref<8x128xf32, #tpu.memory_space<vmem>>, vector<8x128xf32>
    tpu.vector_store %arg7[%c0_9, %c0_10], %16 {strides = array<i32>} : memref<8x128xf32, #tpu.memory_space<vmem>>, vector<8x128xf32>,
    %c0_11 = arith.constant 0 : index
    %c0_12 = arith.constant 0 : index
    %18 = vector.load %arg8[%c0_11, %c0_12] : memref<8x128xf32, #tpu.memory_space<vmem>>, vector<8x128xf32>
    %19 = vector.shape_cast %11 : vector<32x128xf32> to vector<4x8x128xf32>
    %cst_13 = arith.constant dense<0.000000e+00> : vector<8x128xf32>
    %20 = vector.multi_reduction <add>, %19, %cst_13 [0] : vector<4x8x128xf32> to vector<8x128xf32>
    %21 = arith.addf %18, %20 : vector<8x128xf32>
    %c0_14 = arith.constant 0 : index
    %c0_15 = arith.constant 0 : index
    %22 = vector.load %arg8[%c0_14, %c0_15] : memref<8x128xf32, #tpu.memory_space<vmem>>, vector<8x128xf32>
    tpu.vector_store %arg8[%c0_14, %c0_15], %21 {strides = array<i32>} : memref<8x128xf32, #tpu.memory_space<vmem>>, vector<8x128xf32>,
    %c0_16 = arith.constant 0 : index
    %c0_17 = arith.constant 0 : index
    %23 = vector.load %arg9[%c0_16, %c0_17] : memref<8x128xf32, #tpu.memory_space<vmem>>, vector<8x128xf32>
    %24 = vector.shape_cast %4 : vector<32x128xf32> to vector<4x8x128xf32>
    %cst_18 = arith.constant dense<0.000000e+00> : vector<8x128xf32>
    %25 = vector.multi_reduction <add>, %24, %cst_18 [0] : vector<4x8x128xf32> to vector<8x128xf32>
    %26 = arith.addf %23, %25 : vector<8x128xf32>
    %c0_19 = arith.constant 0 : index
    %c0_20 = arith.constant 0 : index
    %27 = vector.load %arg9[%c0_19, %c0_20] : memref<8x128xf32, #tpu.memory_space<vmem>>, vector<8x128xf32>
    tpu.vector_store %arg9[%c0_19, %c0_20], %26 {strides = array<i32>} : memref<8x128xf32, #tpu.memory_space<vmem>>, vector<8x128xf32>,
    %c0_i32_21 = arith.constant 0 : i32
    %28 = arith.cmpi eq, %arg1, %c0_i32_21 : i32
    %29 = arith.extui %28 : i1 to i32
    %c0_i32_22 = arith.constant 0 : i32
    %30 = arith.cmpi ne, %29, %c0_i32_22 : i32
    scf.if %30 {
      %c0_23 = arith.constant 0 : index
      %c0_24 = arith.constant 0 : index
      %31 = vector.load %arg7[%c0_23, %c0_24] : memref<8x128xf32, #tpu.memory_space<vmem>>, vector<8x128xf32>
      %32 = vector.shape_cast %31 : vector<8x128xf32> to vector<1x8x128xf32>
      %cst_25 = arith.constant dense<0.000000e+00> : vector<1xf32>
      %33 = vector.multi_reduction <add>, %32, %cst_25 [1, 2] : vector<1x8x128xf32> to vector<1xf32>
      %34 = vector.shape_cast %33 : vector<1xf32> to vector<1x1x1xf32>
      %35 = vector.extract %34[0, 0, 0] : f32 from vector<1x1x1xf32>
      %36 = vector.broadcast %35 : f32 to vector<1x1x1xf32>
      %c0_26 = arith.constant 0 : index
      %c0_27 = arith.constant 0 : index
      %c0_28 = arith.constant 0 : index
      %37 = vector.load %arg4[%c0_26, %c0_27, %c0_28] : memref<1x1x1xf32, #tpu.memory_space<vmem>>, vector<1x1x1xf32>
      tpu.vector_store %arg4[%c0_26, %c0_27, %c0_28], %36 {strides = array<i32>} : memref<1x1x1xf32, #tpu.memory_space<vmem>>, vector<1x1x1xf32>,
      %c0_29 = arith.constant 0 : index
      %c0_30 = arith.constant 0 : index
      %38 = vector.load %arg8[%c0_29, %c0_30] : memref<8x128xf32, #tpu.memory_space<vmem>>, vector<8x128xf32>
      %39 = vector.shape_cast %38 : vector<8x128xf32> to vector<1x8x128xf32>
      %cst_31 = arith.constant dense<0.000000e+00> : vector<1xf32>
      %40 = vector.multi_reduction <add>, %39, %cst_31 [1, 2] : vector<1x8x128xf32> to vector<1xf32>
      %41 = vector.shape_cast %40 : vector<1xf32> to vector<1x1x1xf32>
      %42 = vector.extract %41[0, 0, 0] : f32 from vector<1x1x1xf32>
      %43 = vector.broadcast %42 : f32 to vector<1x1x1xf32>
      %c0_32 = arith.constant 0 : index
      %c0_33 = arith.constant 0 : index
      %c0_34 = arith.constant 0 : index
      %44 = vector.load %arg5[%c0_32, %c0_33, %c0_34] : memref<1x1x1xf32, #tpu.memory_space<vmem>>, vector<1x1x1xf32>
      tpu.vector_store %arg5[%c0_32, %c0_33, %c0_34], %43 {strides = array<i32>} : memref<1x1x1xf32, #tpu.memory_space<vmem>>, vector<1x1x1xf32>,
      %c0_35 = arith.constant 0 : index
      %c0_36 = arith.constant 0 : index
      %45 = vector.load %arg9[%c0_35, %c0_36] : memref<8x128xf32, #tpu.memory_space<vmem>>, vector<8x128xf32>
      %46 = vector.shape_cast %45 : vector<8x128xf32> to vector<1x8x128xf32>
      %cst_37 = arith.constant dense<0.000000e+00> : vector<1xf32>
      %47 = vector.multi_reduction <add>, %46, %cst_37 [1, 2] : vector<1x8x128xf32> to vector<1xf32>
      %48 = vector.shape_cast %47 : vector<1xf32> to vector<1x1x1xf32>
      %49 = vector.extract %48[0, 0, 0] : f32 from vector<1x1x1xf32>
      %50 = vector.broadcast %49 : f32 to vector<1x1x1xf32>
      %c0_38 = arith.constant 0 : index
      %c0_39 = arith.constant 0 : index
      %c0_40 = arith.constant 0 : index
      %51 = vector.load %arg6[%c0_38, %c0_39, %c0_40] : memref<1x1x1xf32, #tpu.memory_space<vmem>>, vector<1x1x1xf32>
      tpu.vector_store %arg6[%c0_38, %c0_39, %c0_40], %50 {strides = array<i32>} : memref<1x1x1xf32, #tpu.memory_space<vmem>>, vector<1x1x1xf32>,
    } else {
    }
    return
  }
  func.func @transform_0(%arg0: i32, %arg1: i32) -> (i32, i32) {
    %c1_i32 = arith.constant 1 : i32
    %0 = arith.muli %arg0, %c1_i32 : i32
    %1 = arith.addi %0, %arg1 : i32
    %c0_i32 = arith.constant 0 : i32
    %2 = arith.minsi %1, %c0_i32 : i32
    %c0_i32_0 = arith.constant 0 : i32
    %c0_i32_1 = arith.constant 0 : i32
    return %2, %c0_i32_0 : i32, i32
  }
  func.func @transform_1(%arg0: i32, %arg1: i32) -> (i32, i32) {
    %c1_i32 = arith.constant 1 : i32
    %0 = arith.muli %arg0, %c1_i32 : i32
    %1 = arith.addi %0, %arg1 : i32
    %c0_i32 = arith.constant 0 : i32
    %2 = arith.minsi %1, %c0_i32 : i32
    %c0_i32_0 = arith.constant 0 : i32
    %c0_i32_1 = arith.constant 0 : i32
    return %2, %c0_i32_0 : i32, i32
  }
  func.func @transform_2(%arg0: i32, %arg1: i32) -> (i32, i32, i32) {
    %c0_i32 = arith.constant 0 : i32
    %c0_i32_0 = arith.constant 0 : i32
    %c0_i32_1 = arith.constant 0 : i32
    return %arg0, %c0_i32, %c0_i32_0 : i32, i32, i32
  }
  func.func @transform_3(%arg0: i32, %arg1: i32) -> (i32, i32, i32) {
    %c0_i32 = arith.constant 0 : i32
    %c0_i32_0 = arith.constant 0 : i32
    %c0_i32_1 = arith.constant 0 : i32
    return %arg0, %c0_i32, %c0_i32_0 : i32, i32, i32
  }
  func.func @transform_4(%arg0: i32, %arg1: i32) -> (i32, i32, i32) {
    %c0_i32 = arith.constant 0 : i32
    %c0_i32_0 = arith.constant 0 : i32
    %c0_i32_1 = arith.constant 0 : i32
    return %arg0, %c0_i32, %c0_i32_0 : i32, i32, i32
  }
}

</mosaic_0001>

<llo_original>
// kernel: smp_dice_loss.1
$region0: #{smp_dice_loss.1}
  #allocation0 [shape = 'u32[]', space=smem, size = 0x4, offset = 0x4, fixed_abs, tag = 'smem constant byte address 0x4 - core index']
  #allocation1 [shape = 'u32[144,128]{1,0:T(1,128)}', space=vmem, size = 0x12000, scoped, tag = 'internal scratch']
  #allocation2 [shape = 'f32[8,128]{1,0:T(8,128)}', space=vmem, size = 0x1000, scoped, tag = 'scratch operand']
  #allocation3 [shape = 'f32[8,128]{1,0:T(8,128)}', space=vmem, size = 0x1000, scoped, tag = 'scratch operand']
  #allocation4 [shape = 'f32[8,128]{1,0:T(8,128)}', space=vmem, size = 0x1000, scoped, tag = 'scratch operand']
  %s0 = inlined_call_operand.vmem [shape: f32[32,128], index: 0, kind: input, shape index: {}]
  %s1 = inlined_call_operand.vmem [shape: f32[32,128], index: 1, kind: input, shape index: {}]
  %s2 = inlined_call_operand.hbm [shape: f32[1,1,1], index: 2, kind: output, shape index: {0}]
  %s3 = inlined_call_operand.hbm [shape: f32[1,1,1], index: 3, kind: output, shape index: {1}]
  %s4 = inlined_call_operand.hbm [shape: f32[1,1,1], index: 4, kind: output, shape index: {2}]
  %5 = xla_tuple %s2, %s3, %s4
  %s6 = sld [smem:[#allocation0]]
  $region42: #{smp_dice_loss.1} parent=0
    _
  %s8 = ssub.s32 1, %s6
  %s9 = scalar_select 0, %s8, %s6
  $region1: #{smp_dice_loss.1} parent=0
    #allocation5 [shape = 'u8[512]{0}', space=vmem, size = 0x400, scoped, tag = 'output window, operand 0, single buffered']
    #allocation6 [shape = 's32[1]{0}', space=sflag, size = 0x4, scoped, tag = 'scoped memory for smp_dice_loss.1']
    #allocation7 [shape = 'u8[512]{0}', space=vmem, size = 0x400, scoped, tag = 'output window, operand 1, single buffered']
    #allocation8 [shape = 's32[1]{0}', space=sflag, size = 0x4, scoped, tag = 'scoped memory for smp_dice_loss.1']
    #allocation9 [shape = 'u8[512]{0}', space=vmem, size = 0x400, scoped, tag = 'output window, operand 2, single buffered']
    %10 = vsyncpa [#allocation6], 0
    %11 = vsyncpa [#allocation8], 0
    // Predicated region
    $region2: #{smp_dice_loss.1} parent=1 // pred_check
      _
    $region3: #{smp_dice_loss.1} parent=1 // pred_check_branch
      %13 = sbr.rel (0) target = $region5
    $region4: #{smp_dice_loss.1} parent=1 // pred_region
      %s14 = sadd.s32 0, 0
      %p15 = scmp.lt.s32.totalorder %s14, 0
      %s16 = scalar_select %p15, %s14, 0
      %s17 = smul.u32 4, %s16
      %p18 = scmp.lt.s32.totalorder %s17, 3
      %s19 = scalar_select %p18, %s17, 3
      %s20 = smul.addr %s19, 8
      %s21 = scalar_lea.vmem %s0, %s20
      %s22 = sadd.s32 0, 0
      %p23 = scmp.lt.s32.totalorder %s22, 0
      %s24 = scalar_select %p23, %s22, 0
      %s25 = smul.u32 4, %s24
    $region5: #{smp_dice_loss.1} parent=1 // pred_fallthru
      _
    // Predicated region
    $region6: #{smp_dice_loss.1} parent=1 // pred_check
      _
    $region7: #{smp_dice_loss.1} parent=1 // pred_check_branch
      %27 = sbr.rel (0) target = $region9
    $region8: #{smp_dice_loss.1} parent=1 // pred_region
      %s28 = sadd.s32 0, 0
      %p29 = scmp.lt.s32.totalorder %s28, 0
      %s30 = scalar_select %p29, %s28, 0
      %s31 = smul.u32 4, %s30
      %p32 = scmp.lt.s32.totalorder %s31, 3
      %s33 = scalar_select %p32, %s31, 3
      %s34 = smul.addr %s33, 8
      %s35 = scalar_lea.vmem %s1, %s34
      %s36 = sadd.s32 0, 0
      %p37 = scmp.lt.s32.totalorder %s36, 0
      %s38 = scalar_select %p37, %s36, 0
      %s39 = smul.u32 4, %s38
    $region9: #{smp_dice_loss.1} parent=1 // pred_fallthru
      _
    %s40 = sadd.s32 0, 0
    %p41 = scmp.lt.s32.totalorder %s40, 0
    %s42 = scalar_select %p41, %s40, 0
    %s43 = smul.u32 4, %s42
    %p44 = scmp.lt.s32.totalorder %s43, 3
    %s45 = scalar_select %p44, %s43, 3
    %s46 = smul.addr %s45, 8
    %s47 = scalar_lea.vmem %s0, %s46
    %s48 = sadd.s32 0, 0
    %p49 = scmp.lt.s32.totalorder %s48, 0
    %s50 = scalar_select %p49, %s48, 0
    %s51 = smul.u32 4, %s50
    %p52 = scmp.lt.s32.totalorder %s51, 3
    %s53 = scalar_select %p52, %s51, 3
    %s54 = smul.addr %s53, 8
    %s55 = scalar_lea.vmem %s1, %s54
    %s56 = sadd.s32 0, 0
    %p57 = scmp.lt.s32.totalorder %s56, 0
    %s58 = scalar_select %p57, %s56, 0
    %s59 = smul.u32 4, %s58
    %p60 = scmp.lt.s32.totalorder %s59, 3
    %s61 = scalar_select %p60, %s59, 3
    %s62 = smul.addr %s61, 8
    %s63 = scalar_lea.vmem %s0, %s62
    %s64 = sadd.s32 0, 0
    %p65 = scmp.lt.s32.totalorder %s64, 0
    %s66 = scalar_select %p65, %s64, 0
    %s67 = smul.u32 4, %s66
    %s68 = sadd.s32 0, 0
    %p69 = scmp.lt.s32.totalorder %s68, 0
    %s70 = scalar_select %p69, %s68, 0
    %s71 = smul.u32 4, %s70
    %p72 = scmp.lt.s32.totalorder %s71, 3
    %s73 = scalar_select %p72, %s71, 3
    %s74 = smul.addr %s73, 8
    %s75 = scalar_lea.vmem %s1, %s74
    %s76 = sadd.s32 0, 0
    %p77 = scmp.lt.s32.totalorder %s76, 0
    %s78 = scalar_select %p77, %s76, 0
    %s79 = smul.u32 4, %s78
    %p80 = scmp.eq.s32.totalorder 0, 0
    // Predicated region
    $region10: #{smp_dice_loss.1} parent=1 // pred_check
      %p81 = pneg %p80
    $region11: #{smp_dice_loss.1} parent=1 // pred_check_branch
      %83 = sbr.rel (%p81) target = $region13
    $region12: #{smp_dice_loss.1} parent=1 // pred_region
      %84 = vst [vmem:[#allocation2] sm:$0xff] 0.0
      %85 = vst [vmem:[#allocation3] sm:$0xff] 0.0
      %86 = vst [vmem:[#allocation4] sm:$0xff] 0.0
    $region13: #{smp_dice_loss.1} parent=1 // pred_fallthru
      _
    %v87 = vld [vmem:[%s63] sm:$0xff]
    %v88 = vld [vmem:[%s63 + $0x8] sm:$0xff]
    %v89 = vld [vmem:[%s63 + $0x10] sm:$0xff]
    %v90 = vld [vmem:[%s63 + $0x18] sm:$0xff]
    %v91 = vld [vmem:[%s75] sm:$0xff]
    %v92 = vld [vmem:[%s75 + $0x8] sm:$0xff]
    %v93 = vld [vmem:[%s75 + $0x10] sm:$0xff]
    %v94 = vld [vmem:[%s75 + $0x18] sm:$0xff]
    %v95 = vmul.f32 %v87, 0.5
    %v96 = vmul.f32 %v88, 0.5
    %v97 = vmul.f32 %v89, 0.5
    %v98 = vmul.f32 %v90, 0.5
    %v99 = vtanh.pop %v95
    %v100 = vtanh.pop %v96
    %v101 = vtanh.pop %v97
    %v102 = vtanh.pop %v98
    %v103 = vadd.f32 %v99, 1.0
    %v104 = vadd.f32 %v100, 1.0
    %v105 = vadd.f32 %v101, 1.0
    %v106 = vadd.f32 %v102, 1.0
    %v107 = vmul.f32 %v103, 0.5
    %v108 = vmul.f32 %v104, 0.5
    %v109 = vmul.f32 %v105, 0.5
    %v110 = vmul.f32 %v106, 0.5
    %v111 = vld [vmem:[#allocation2] sm:$0xff]
    %v112 = vmul.f32 %v107, %v91
    %v113 = vmul.f32 %v108, %v92
    %v114 = vmul.f32 %v109, %v93
    %v115 = vmul.f32 %v110, %v94
    %v116 = vadd.f32 %v112, %v113
    %v117 = vadd.f32 %v116, %v114
    %v118 = vadd.f32 %v117, %v115
    %v119 = vadd.f32 %v111, %v118
    %120 = vst [vmem:[#allocation2] sm:$0xff] %v119
    %v121 = vld [vmem:[#allocation3] sm:$0xff]
    %v122 = vadd.f32 %v107, %v108
    %v123 = vadd.f32 %v122, %v109
    %v124 = vadd.f32 %v123, %v110
    %v125 = vadd.f32 %v121, %v124
    %126 = vst [vmem:[#allocation3] sm:$0xff] %v125
    %v127 = vld [vmem:[#allocation4] sm:$0xff]
    %v128 = vadd.f32 %v91, %v92
    %v129 = vadd.f32 %v128, %v93
    %v130 = vadd.f32 %v129, %v94
    %v131 = vadd.f32 %v127, %v130
    %132 = vst [vmem:[#allocation4] sm:$0xff] %v131
    // Predicated region
    $region14: #{smp_dice_loss.1} parent=1 // pred_check
      %p133 = pneg %p80
    $region15: #{smp_dice_loss.1} parent=1 // pred_check_branch
      %135 = sbr.rel (%p133) target = $region17
    $region16: #{smp_dice_loss.1} parent=1 // pred_region
      %v136 = vld [vmem:[#allocation2] sm:$0xff]
      %137 = vadd.xlane.f32.xlu0 %v136
      %v138 = vpop.xlane.xlu0 %137
      %v139 = vrot.slane %v138, 4
      %v140 = vadd.f32 %v138, %v139
      %v141 = vrot.slane %v140, 2
      %v142 = vadd.f32 %v140, %v141
      %v143 = vrot.slane %v142, 1
      %v144 = vadd.f32 %v142, %v143
      %s145 = vtos %v144
      %v146 = vstv %s145
      %vm147 = vcmask 0
      %148 = vst.msk [vmem:[#allocation5] sm:$0x1] %vm147, %v146
      %v149 = vld [vmem:[#allocation3] sm:$0xff]
      %150 = vadd.xlane.f32.xlu0 %v149
      %v151 = vpop.xlane.xlu0 %150
      %v152 = vrot.slane %v151, 4
      %v153 = vadd.f32 %v151, %v152
      %v154 = vrot.slane %v153, 2
      %v155 = vadd.f32 %v153, %v154
      %v156 = vrot.slane %v155, 1
      %v157 = vadd.f32 %v155, %v156
      %s158 = vtos %v157
      %v159 = vstv %s158
      %160 = vst.msk [vmem:[#allocation7] sm:$0x1] %vm147, %v159
      %v161 = vld [vmem:[#allocation4] sm:$0xff]
      %162 = vadd.xlane.f32.xlu0 %v161
      %v163 = vpop.xlane.xlu0 %162
      %v164 = vrot.slane %v163, 4
      %v165 = vadd.f32 %v163, %v164
      %v166 = vrot.slane %v165, 2
      %v167 = vadd.f32 %v165, %v166
      %v168 = vrot.slane %v167, 1
      %v169 = vadd.f32 %v167, %v168
      %s170 = vtos %v169
      %v171 = vstv %s170
      %172 = vst.msk [vmem:[#allocation9] sm:$0x1] %vm147, %v171
    $region17: #{smp_dice_loss.1} parent=1 // pred_fallthru
      _
    // Predicated region
    $region18: #{smp_dice_loss.1} parent=1 // pred_check
      _
    $region19: #{smp_dice_loss.1} parent=1 // pred_check_branch
      %174 = sbr.rel (0) target = $region21
    $region20: #{smp_dice_loss.1} parent=1 // pred_region
      %s176 = ssub.s32 16, 16
      %177 = vsyncadd [#allocation6], %s176
      %s179 = sshll.u32 [#allocation5], 4
      %s180 = int_to_ptr.vmem [resolvable:$true] %s179
      %182 = dma.vmem_to_hbm [thread:$0]  %s180, 16, %s2, [#allocation6]
    $region21: #{smp_dice_loss.1} parent=1 // pred_fallthru
      _
    // Predicated region
    $region22: #{smp_dice_loss.1} parent=1 // pred_check
      _
    $region23: #{smp_dice_loss.1} parent=1 // pred_check_branch
      %184 = sbr.rel (0) target = $region25
    $region24: #{smp_dice_loss.1} parent=1 // pred_region
      %s186 = ssub.s32 16, 16
      %187 = vsyncadd [#allocation8], %s186
      %s189 = sshll.u32 [#allocation7], 4
      %s190 = int_to_ptr.vmem [resolvable:$true] %s189
      %192 = dma.vmem_to_hbm [thread:$0]  %s190, 16, %s3, [#allocation8]
    $region25: #{smp_dice_loss.1} parent=1 // pred_fallthru
      _
    // Predicated region
    $region26: #{smp_dice_loss.1} parent=1 // pred_check
      _
    $region27: #{smp_dice_loss.1} parent=1 // pred_check_branch
      %194 = sbr.rel (0) target = $region29
    $region28: #{smp_dice_loss.1} parent=1 // pred_region
      %s196 = ssub.s32 16, 16
      %197 = vsyncadd [#allocation8], %s196
      %s199 = sshll.u32 [#allocation9], 4
      %s200 = int_to_ptr.vmem [resolvable:$true] %s199
      %202 = dma.vmem_to_hbm [thread:$0]  %s200, 16, %s4, [#allocation8]
    $region29: #{smp_dice_loss.1} parent=1 // pred_fallthru
      _
    // Predicated region
    $region30: #{smp_dice_loss.1} parent=1 // pred_check
      _
    $region31: #{smp_dice_loss.1} parent=1 // pred_check_branch
      %204 = sbr.rel (0) target = $region33
    $region32: #{smp_dice_loss.1} parent=1 // pred_region
      %205 = dma.done [#allocation6], 16
    $region33: #{smp_dice_loss.1} parent=1 // pred_fallthru
      _
    // Predicated region
    $region34: #{smp_dice_loss.1} parent=1 // pred_check
      _
    $region35: #{smp_dice_loss.1} parent=1 // pred_check_branch
      %207 = sbr.rel (0) target = $region37
    $region36: #{smp_dice_loss.1} parent=1 // pred_region
      %208 = dma.done [#allocation8], 16
    $region37: #{smp_dice_loss.1} parent=1 // pred_fallthru
      _
    // Predicated region
    $region38: #{smp_dice_loss.1} parent=1 // pred_check
      _
    $region39: #{smp_dice_loss.1} parent=1 // pred_check_branch
      %210 = sbr.rel (0) target = $region41
    $region40: #{smp_dice_loss.1} parent=1 // pred_region
      %211 = dma.done [#allocation8], 16
    $region41: #{smp_dice_loss.1} parent=1 // pred_fallthru
      _
    %212 = vsyncpa [#allocation6], 1
    %213 = vsyncpa [#allocation8], 1

</llo_original>
